<compile_context>
chip_gen: v6e
topology: v6e:2x2x1
jax: 0.10.0
libtpu: 0.0.40
codegen_flags: <defaults>
</compile_context>

<pallas_src>
import functools
import math

import jax
import jax.numpy as jnp
from jax import lax
from jax.experimental import pallas as pl
from jax.experimental.pallas import tpu as pltpu

_NEG_BIG = -1.0e30  # finite "-inf" for padded vocab columns (exp -> 0, no inf-inf risk)


def _round_up(x, m):
    return (x + m - 1) // m * m


def _vmem_capacity_bytes():
    """Physical per-core VMEM; conservative 64 MiB (v7x) fallback."""
    try:
        cap = getattr(pltpu.get_tpu_info(), "vmem_capacity_bytes", None)
        if cap:
            return int(cap)
    except Exception:
        pass
    return 64 * 2 ** 20


# --------------------------------------------------------------------------- kernels
def _fused_lm_head_kernel(x_ref, w_ref, b_ref, out_ref, strip_sc, m_sc, l_sc, *, tn, nj):
    """Grid = (row tile i ["parallel"], vocab tile j ["arbitrary"]).

    Streams (tn, hidden) weight tiles, keeps the (tm, vocab) raw-logits strip
    resident in VMEM, runs an online logsumexp, and writes the normalized
    log-probabilities to HBM once per row tile (at j == nj - 1)."""
    j = pl.program_id(1)

    @pl.when(j == 0)
    def _():
        m_sc[...] = jnp.full_like(m_sc[...], -jnp.inf)
        l_sc[...] = jnp.zeros_like(l_sc[...])

    # (tm, hidden) bf16 . (tn, hidden) bf16 -> (tm, tn) f32   (x @ W^T on the MXU)
    s = lax.dot_general(
        x_ref[...], w_ref[...],
        dimension_numbers=(((1,), (1,)), ((), ())),
        preferred_element_type=jnp.float32,
    ) + b_ref[...]

    # online logsumexp over the vocab (lane) axis, accumulated across vocab tiles
    m_prev = m_sc[...]
    m_new = jnp.maximum(m_prev, jnp.max(s, axis=-1, keepdims=True))
    l_new = (jnp.exp(m_prev - m_new) * l_sc[...]
             + jnp.sum(jnp.exp(s - m_new), axis=-1, keepdims=True))
    m_sc[...] = m_new
    l_sc[...] = l_new

    # stash the raw-logits tile in the VMEM strip (dynamic index on leading axis)
    strip_sc[j] = s

    @pl.when(j == nj - 1)
    def _():
        lse = m_new + jnp.log(l_new)
        for k in range(nj):  # static unroll -> lane-aligned, unmasked stores
            out_ref[:, k * tn:(k + 1) * tn] = (strip_sc[k] - lse).astype(out_ref.dtype)


def _streamed_lm_head_kernel(x_ref, w_ref, b_ref, logits_ref, lse_ref, m_sc, l_sc):
    """Fallback: stream raw f32 logits + lse to HBM; a second pass normalizes."""
    j = pl.program_id(1)

    @pl.when(j == 0)
    def _():
        m_sc[...] = jnp.full_like(m_sc[...], -jnp.inf)
        l_sc[...] = jnp.zeros_like(l_sc[...])

    s = lax.dot_general(
        x_ref[...], w_ref[...],
        dimension_numbers=(((1,), (1,)), ((), ())),
        preferred_element_type=jnp.float32,
    ) + b_ref[...]

    m_prev = m_sc[...]
    m_new = jnp.maximum(m_prev, jnp.max(s, axis=-1, keepdims=True))
    l_new = (jnp.exp(m_prev - m_new) * l_sc[...]
             + jnp.sum(jnp.exp(s - m_new), axis=-1, keepdims=True))
    m_sc[...] = m_new
    l_sc[...] = l_new

    # TODO(synk): bf16 raw logits would halve this stream at ~bf16-eps accuracy cost.
    logits_ref[...] = s
    # lse block is resident across j (index (i, 0)); only the final value reaches HBM
    lse_ref[...] = m_new + jnp.log(l_new)


def _normalize_kernel(logits_ref, lse_ref, o_ref):
    o_ref[...] = (logits_ref[...] - lse_ref[...]).astype(o_ref.dtype)


# --------------------------------------------------------------------------- planning
def _plan(M, hidden, vocab, cap, tm=None, tn=None, two_pass=None):
    budget = int(cap * 0.70)

    # ---- vocab tile (lane-dense, prefer 256-multiples for the 256-wide MXU) ----
    if tn is None:
        v128 = _round_up(vocab, 128)
        if 2 * v128 * hidden * 2 <= min(budget // 4, 8 * 2 ** 20):
            tn = v128                                   # whole (padded) vocab resident
        else:
            tn = next((c for c in (1024, 512, 256, 128)
                       if 2 * c * hidden * 2 <= budget // 4), 128)
    tn = _round_up(int(tn), 128)
    vocab_pad = _round_up(vocab, tn)
    nj = vocab_pad // tn

    # ---- row tile candidates (maximize: weight is re-streamed once per row tile) ----
    top = _round_up(M, 8)
    if tm is not None:
        cands = [_round_up(int(tm), 8)]
    else:
        cands = sorted({c for c in (512, 256, 128, 64, 32, 16, 8) if c <= top}
                       | ({top} if top <= 512 else set()), reverse=True)
        if not cands:
            cands = [8]

    def fused_vmem(t):
        return (2 * t * hidden * 2          # x blocks (bf16, double-buffered)
                + 2 * tn * hidden * 2       # weight blocks
                + 2 * 8 * tn * 4            # bias blocks (sublane-padded)
                + 2 * t * vocab_pad * 4     # resident output strip (double-buffered)
                + t * vocab_pad * 4         # raw-logits strip scratch
                + 2 * t * 128 * 4           # m/l scratch (lane-padded)
                + 2 * t * tn * 4)           # temporaries slack

    def streamed_vmem(t):
        return (2 * t * hidden * 2 + 2 * tn * hidden * 2 + 2 * 8 * tn * 4
                + 2 * t * tn * 4            # logits out blocks
                + 4 * t * 128 * 4           # lse out blocks + m/l scratch
                + 2 * t * tn * 4)           # temporaries slack

    tm_a = next((c for c in cands if fused_vmem(c) <= budget), None)
    tm_b = next((c for c in cands if streamed_vmem(c) <= budget), None)
    if tm_a is None and tm_b is None:
        raise ValueError("no row tile fits the VMEM budget; reduce tn")

    def traffic(t, logits_passes):
        m_pad = _round_up(M, t)
        return ((m_pad // t) * vocab_pad * hidden * 2    # weight re-stream
                + m_pad * hidden * 2                     # x read (once)
                + logits_passes * m_pad * vocab_pad * 4)  # logits HBM passes

    if two_pass is None:
        use_fused = tm_a is not None and (tm_b is None or traffic(tm_a, 1) <= traffic(tm_b, 3))
    else:
        use_fused = not two_pass
        if use_fused and tm_a is None:
            raise ValueError("fused path does not fit VMEM for these shapes")
        if (not use_fused) and tm_b is None:
            raise ValueError("streamed path does not fit VMEM for these shapes")

    tm_sel = tm_a if use_fused else tm_b
    footprint = fused_vmem(tm_sel) if use_fused else streamed_vmem(tm_sel)
    return tm_sel, tn, vocab_pad, nj, use_fused, footprint, budget


# --------------------------------------------------------------------------- forward
def seq_language_model_forward(x, weight, bias, *, tm=None, tn=None, two_pass=None):
    """
    x:      [batch, seq, hidden]
    weight: [vocab, hidden]   (PyTorch nn.Linear layout, NOT pre-transposed)
    bias:   [vocab]
    returns [seq, batch, vocab] float32 log-probabilities
            == LogSoftmax(Linear(x), dim=-1).transpose(0, 1)
    """
    batch, seq, hidden = x.shape
    vocab = weight.shape[0]
    M = batch * seq

    cap = _vmem_capacity_bytes()
    tm_, tn_, vocab_pad, nj, use_fused, footprint, budget = _plan(
        M, hidden, vocab, cap, tm=tm, tn=tn, two_pass=two_pass)
    M_pad = _round_up(M, tm_)
    n_rows = M_pad // tm_

    # ---- operand prep (cheap layout / dtype glue on the small tensors) ----------
    # apply transpose(0,1) to the input rows (M x hidden), not to the M x vocab output.
    # TODO(synk): fold this (seq,batch) reorder + pad into a 3-D input BlockSpec index_map.
    xt = jnp.transpose(x, (1, 0, 2)).reshape(M, hidden)
    if M_pad != M:
        xt = jnp.pad(xt, ((0, M_pad - M), (0, 0)))
    x_bf16 = xt.astype(jnp.bfloat16)          # MXU-native operands
    w_bf16 = weight.astype(jnp.bfloat16)      # no weight.T materialized in HBM
    b_f32 = bias.astype(jnp.float32)
    if vocab_pad != vocab:                    # pad vocab: zero weights, -1e30 bias
        w_bf16 = jnp.pad(w_bf16, ((0, vocab_pad - vocab), (0, 0)))
        b_f32 = jnp.pad(b_f32, (0, vocab_pad - vocab), constant_values=_NEG_BIG)
    b2d = b_f32.reshape(1, vocab_pad)

    out_dtype = jnp.float32
    # TODO(synk): emit bf16 log-probs to halve the output HBM stream if downstream tolerates it.

    vmem_limit = int(min(cap, max(footprint + footprint // 4, 16 * 2 ** 20)))

    in_specs = [
        pl.BlockSpec((tm_, hidden), lambda i, j: (i, 0)),   # x rows (resident across j)
        pl.BlockSpec((tn_, hidden), lambda i, j: (j, 0)),   # weight tile (streamed)
        pl.BlockSpec((1, tn_), lambda i, j: (0, j)),        # bias tile
    ]

    if use_fused:
        kernel = functools.partial(_fused_lm_head_kernel, tn=tn_, nj=nj)
        logp = pl.pallas_call(
            kernel,
            out_shape=jax.ShapeDtypeStruct((M_pad, vocab_pad), out_dtype),
            grid_spec=pltpu.PrefetchScalarGridSpec(
                num_scalar_prefetch=0,
                grid=(n_rows, nj),
                in_specs=in_specs,
                out_specs=pl.BlockSpec((tm_, vocab_pad), lambda i, j: (i, 0)),
                scratch_shapes=[pltpu.VMEM((nj, tm_, tn_), jnp.float32),  # logits strip
                                pltpu.VMEM((tm_, 1), jnp.float32),        # running max
                                pltpu.VMEM((tm_, 1), jnp.float32)],       # running sum
            ),
            compiler_params=pltpu.CompilerParams(
                dimension_semantics=("parallel", "arbitrary"),
                vmem_limit_bytes=vmem_limit,
            ),
        )(x_bf16, w_bf16, b2d)
    else:
        logits, lse = pl.pallas_call(
            _streamed_lm_head_kernel,
            out_shape=(jax.ShapeDtypeStruct((M_pad, vocab_pad), jnp.float32),
                       jax.ShapeDtypeStruct((M_pad, 1), jnp.float32)),
            grid_spec=pltpu.PrefetchScalarGridSpec(
                num_scalar_prefetch=0,
                grid=(n_rows, nj),
                in_specs=in_specs,
                out_specs=[pl.BlockSpec((tm_, tn_), lambda i, j: (i, j)),
                           pl.BlockSpec((tm_, 1), lambda i, j: (i, 0))],
                scratch_shapes=[pltpu.VMEM((tm_, 1), jnp.float32),
                                pltpu.VMEM((tm_, 1), jnp.float32)],
            ),
            compiler_params=pltpu.CompilerParams(
                dimension_semantics=("parallel", "arbitrary"),
                vmem_limit_bytes=vmem_limit,
            ),
        )(x_bf16, w_bf16, b2d)

        # pure-streaming elementwise normalize: use the biggest lane-dense blocks that fit
        rm = tm_
        cn = tn_
        for k in range(nj, 0, -1):
            if nj % k == 0 and (5 * rm * (k * tn_) * 4 + 4 * rm * 128 * 4) <= budget:
                cn = k * tn_
                break
        norm_fp = 5 * rm * cn * 4 + 4 * rm * 128 * 4
        norm_vmem = int(min(cap, max(norm_fp + norm_fp // 4, 16 * 2 ** 20)))
        logp = pl.pallas_call(
            _normalize_kernel,
            out_shape=jax.ShapeDtypeStruct((M_pad, vocab_pad), out_dtype),
            grid_spec=pltpu.PrefetchScalarGridSpec(
                num_scalar_prefetch=0,
                grid=(M_pad // rm, vocab_pad // cn),
                in_specs=[pl.BlockSpec((rm, cn), lambda i, j: (i, j)),
                          pl.BlockSpec((rm, 1), lambda i, j: (i, 0))],
                out_specs=pl.BlockSpec((rm, cn), lambda i, j: (i, j)),
            ),
            compiler_params=pltpu.CompilerParams(
                dimension_semantics=("parallel", "parallel"),
                vmem_limit_bytes=norm_vmem,
            ),
            input_output_aliases={0: 0},    # normalize the logits buffer in place
        )(logits, lse)

    # un-pad; rows are already in (seq, batch) order, so the reshape == transpose(0, 1)
    return logp[:M, :vocab].reshape(seq, batch, vocab)


# --------------------------------------------------------------------------- reference / test
def _reference(x, weight, bias):
    """Pure-JAX reference with the same bf16 operand rounding as the kernel."""
    xw = x.astype(jnp.bfloat16).astype(jnp.float32)
    ww = weight.astype(jnp.bfloat16).astype(jnp.float32)
    logits = jnp.einsum("bsh,vh->bsv", xw, ww,
                        precision=jax.lax.Precision.HIGHEST) + bias.astype(jnp.float32)
    return jnp.transpose(jax.nn.log_softmax(logits, axis=-1), (1, 0, 2))


if __name__ == "__main__":
    fwd = jax.jit(seq_language_model_forward, static_argnames=("tm", "tn", "two_pass"))

    key = jax.random.PRNGKey(0)

    def make_inputs(key, batch, seq, hidden, vocab):
        kx, kw, kb = jax.random.split(key, 3)
        bound = 1.0 / math.sqrt(hidden)   # nn.Linear default init range
        weight = jax.random.uniform(kw, (vocab, hidden), jnp.float32, -bound, bound)
        bias = jax.random.uniform(kb, (vocab,), jnp.float32, -bound, bound)
        x = jax.random.normal(kx, (batch, seq, hidden), jnp.float32)
        return x, weight, bias

    k1, k2 = jax.random.split(key)

    # --- test 1: fused path, single vocab tile -------------------------------------
    x, w, b = make_inputs(k1, batch=2, seq=8, hidden=32, vocab=128)
    out = jax.block_until_ready(fwd(x, w, b))
    assert out.shape == (8, 2, 128)
    assert bool(jnp.allclose(jnp.exp(out).sum(axis=-1), 1.0, atol=1e-3))
    assert bool(jnp.allclose(out, _reference(x, w, b), atol=2e-3, rtol=2e-3))

    # --- test 2: fused path, vocab-tiled online logsumexp + vocab padding (500->512)
    #             + row padding (15->16) -------------------------------------------
    x2, w2, b2 = make_inputs(k2, batch=3, seq=5, hidden=32, vocab=500)
    out2 = jax.block_until_ready(fwd(x2, w2, b2, tn=128))
    ref2 = _reference(x2, w2, b2)
    assert out2.shape == (5, 3, 500)
    assert bool(jnp.allclose(jnp.exp(out2).sum(axis=-1), 1.0, atol=1e-3))
    assert bool(jnp.allclose(out2, ref2, atol=2e-3, rtol=2e-3))

    # --- test 3: streamed two-pass fallback on the same shapes ----------------------
    out3 = jax.block_until_ready(fwd(x2, w2, b2, tn=128, two_pass=True))
    assert out3.shape == (5, 3, 500)
    assert bool(jnp.allclose(jnp.exp(out3).sum(axis=-1), 1.0, atol=1e-3))
    assert bool(jnp.allclose(out3, ref2, atol=2e-3, rtol=2e-3))

    print("KERNEL_OK")
</pallas_src>

<mosaic_0001>
module attributes {stable_mosaic.version = 11 : i64} {
  func.func @_fused_lm_head_kernel(%arg0: i32, %arg1: i32, %arg2: memref<16x32xbf16, #tpu.memory_space<vmem>>, %arg3: memref<128x32xbf16, #tpu.memory_space<vmem>>, %arg4: memref<1x128xf32, #tpu.memory_space<vmem>>, %arg5: memref<16x128xf32, #tpu.memory_space<vmem>>, %arg6: memref<1x16x128xf32, #tpu.memory_space<vmem>>, %arg7: memref<16x1xf32, #tpu.memory_space<vmem>>, %arg8: memref<16x1xf32, #tpu.memory_space<vmem>>) attributes {dimension_semantics = [#tpu.dimension_semantics<parallel>, #tpu.dimension_semantics<arbitrary>], iteration_bounds = array<i64: 1, 1>, scalar_prefetch = 0 : i64, scratch_operands = 3 : i64, tpu.core_type = #tpu.core_type<tc>, window_params = [{transform_indices = @transform_0, window_bounds = array<i64: 16, 32>}, {transform_indices = @transform_1, window_bounds = array<i64: 128, 32>}, {transform_indices = @transform_2, window_bounds = array<i64: 1, 128>}, {transform_indices = @transform_3, window_bounds = array<i64: 16, 128>}]} {
    %c0_i32 = arith.constant 0 : i32
    %0 = arith.cmpi eq, %arg1, %c0_i32 : i32
    %1 = arith.extui %0 : i1 to i32
    %c0_i32_0 = arith.constant 0 : i32
    %2 = arith.cmpi ne, %1, %c0_i32_0 : i32
    scf.if %2 {
      %cst_20 = arith.constant 0xFF800000 : f32
      %32 = vector.broadcast %cst_20 : f32 to vector<16x1xf32>
      %c0_21 = arith.constant 0 : index
      %c0_22 = arith.constant 0 : index
      %33 = vector.load %arg7[%c0_21, %c0_22] : memref<16x1xf32, #tpu.memory_space<vmem>>, vector<16x1xf32>
      tpu.vector_store %arg7[%c0_21, %c0_22], %32 {strides = array<i32>} : memref<16x1xf32, #tpu.memory_space<vmem>>, vector<16x1xf32>,
      %cst_23 = arith.constant 0.000000e+00 : f32
      %34 = vector.broadcast %cst_23 : f32 to vector<16x1xf32>
      %c0_24 = arith.constant 0 : index
      %c0_25 = arith.constant 0 : index
      %35 = vector.load %arg8[%c0_24, %c0_25] : memref<16x1xf32, #tpu.memory_space<vmem>>, vector<16x1xf32>
      tpu.vector_store %arg8[%c0_24, %c0_25], %34 {strides = array<i32>} : memref<16x1xf32, #tpu.memory_space<vmem>>, vector<16x1xf32>,
    } else {
    }
    %c0 = arith.constant 0 : index
    %c0_1 = arith.constant 0 : index
    %3 = vector.load %arg2[%c0, %c0_1] : memref<16x32xbf16, #tpu.memory_space<vmem>>, vector<16x32xbf16>
    %c0_2 = arith.constant 0 : index
    %c0_3 = arith.constant 0 : index
    %4 = vector.load %arg3[%c0_2, %c0_3] : memref<128x32xbf16, #tpu.memory_space<vmem>>, vector<128x32xbf16>
    %cst = arith.constant dense<0.000000e+00> : vector<16x128xf32>
    %5 = tpu.matmul %3, %4, %cst {dimension_numbers = #tpu.dot_dimension_numbers<[1], [1], [0], [0], [0, 0, 1, 0], [], []>} : vector<16x32xbf16>, vector<128x32xbf16>, vector<16x128xf32> -> vector<16x128xf32>
    %c0_4 = arith.constant 0 : index
    %c0_5 = arith.constant 0 : index
    %6 = vector.load %arg4[%c0_4, %c0_5] : memref<1x128xf32, #tpu.memory_space<vmem>>, vector<1x128xf32>
    %7 = vector.broadcast %6 : vector<1x128xf32> to vector<16x128xf32>
    %8 = arith.addf %5, %7 : vector<16x128xf32>
    %c0_6 = arith.constant 0 : index
    %c0_7 = arith.constant 0 : index
    %9 = vector.load %arg7[%c0_6, %c0_7] : memref<16x1xf32, #tpu.memory_space<vmem>>, vector<16x1xf32>
    %cst_8 = arith.constant dense<0xFF800000> : vector<16xf32>
    %10 = vector.multi_reduction <maximumf>, %8, %cst_8 [1] : vector<16x128xf32> to vector<16xf32>
    %11 = vector.shape_cast %10 : vector<16xf32> to vector<16x1xf32>
    %12 = arith.maximumf %9, %11 : vector<16x1xf32>
    %13 = arith.subf %9, %12 : vector<16x1xf32>
    %14 = math.exp %13 : vector<16x1xf32>
    %c0_9 = arith.constant 0 : index
    %c0_10 = arith.constant 0 : index
    %15 = vector.load %arg8[%c0_9, %c0_10] : memref<16x1xf32, #tpu.memory_space<vmem>>, vector<16x1xf32>
    %16 = arith.mulf %14, %15 : vector<16x1xf32>
    %17 = vector.broadcast %12 : vector<16x1xf32> to vector<16x128xf32>
    %18 = arith.subf %8, %17 : vector<16x128xf32>
    %19 = math.exp %18 : vector<16x128xf32>
    %cst_11 = arith.constant dense<0.000000e+00> : vector<16xf32>
    %20 = vector.multi_reduction <add>, %19, %cst_11 [1] : vector<16x128xf32> to vector<16xf32>
    %21 = vector.shape_cast %20 : vector<16xf32> to vector<16x1xf32>
    %22 = arith.addf %16, %21 : vector<16x1xf32>
    %c0_12 = arith.constant 0 : index
    %c0_13 = arith.constant 0 : index
    %23 = vector.load %arg7[%c0_12, %c0_13] : memref<16x1xf32, #tpu.memory_space<vmem>>, vector<16x1xf32>
    tpu.vector_store %arg7[%c0_12, %c0_13], %12 {strides = array<i32>} : memref<16x1xf32, #tpu.memory_space<vmem>>, vector<16x1xf32>,
    %c0_14 = arith.constant 0 : index
    %c0_15 = arith.constant 0 : index
    %24 = vector.load %arg8[%c0_14, %c0_15] : memref<16x1xf32, #tpu.memory_space<vmem>>, vector<16x1xf32>
    tpu.vector_store %arg8[%c0_14, %c0_15], %22 {strides = array<i32>} : memref<16x1xf32, #tpu.memory_space<vmem>>, vector<16x1xf32>,
    %25 = arith.index_cast %arg1 : i32 to index
    %c0_16 = arith.constant 0 : index
    %c0_17 = arith.constant 0 : index
    %26 = vector.load %arg6[%25, %c0_16, %c0_17] : memref<1x16x128xf32, #tpu.memory_space<vmem>>, vector<1x16x128xf32>
    %27 = vector.shape_cast %26 : vector<1x16x128xf32> to vector<16x128xf32>
    %28 = vector.shape_cast %8 : vector<16x128xf32> to vector<1x16x128xf32>
    tpu.vector_store %arg6[%25, %c0_16, %c0_17], %28 {strides = array<i32>} : memref<1x16x128xf32, #tpu.memory_space<vmem>>, vector<1x16x128xf32>,
    %c0_i32_18 = arith.constant 0 : i32
    %29 = arith.cmpi eq, %arg1, %c0_i32_18 : i32
    %30 = arith.extui %29 : i1 to i32
    %c0_i32_19 = arith.constant 0 : i32
    %31 = arith.cmpi ne, %30, %c0_i32_19 : i32
    scf.if %31 {
      %32 = math.log %22 : vector<16x1xf32>
      %33 = arith.addf %12, %32 : vector<16x1xf32>
      %c0_20 = arith.constant 0 : index
      %c0_21 = arith.constant 0 : index
      %c0_22 = arith.constant 0 : index
      %34 = vector.load %arg6[%c0_20, %c0_21, %c0_22] : memref<1x16x128xf32, #tpu.memory_space<vmem>>, vector<1x16x128xf32>
      %35 = vector.shape_cast %34 : vector<1x16x128xf32> to vector<16x128xf32>
      %36 = vector.broadcast %33 : vector<16x1xf32> to vector<16x128xf32>
      %37 = arith.subf %35, %36 : vector<16x128xf32>
      %c0_23 = arith.constant 0 : index
      %c0_24 = arith.constant 0 : index
      %38 = vector.load %arg5[%c0_23, %c0_24] : memref<16x128xf32, #tpu.memory_space<vmem>>, vector<16x128xf32>
      tpu.vector_store %arg5[%c0_23, %c0_24], %37 {strides = array<i32>} : memref<16x128xf32, #tpu.memory_space<vmem>>, vector<16x128xf32>,
    } else {
    }
    return
  }
  func.func @transform_0(%arg0: i32, %arg1: i32) -> (i32, i32) {
    %c0_i32 = arith.constant 0 : i32
    %c0_i32_0 = arith.constant 0 : i32
    return %arg0, %c0_i32 : i32, i32
  }
  func.func @transform_1(%arg0: i32, %arg1: i32) -> (i32, i32) {
    %c0_i32 = arith.constant 0 : i32
    %c0_i32_0 = arith.constant 0 : i32
    return %arg1, %c0_i32 : i32, i32
  }
  func.func @transform_2(%arg0: i32, %arg1: i32) -> (i32, i32) {
    %c0_i32 = arith.constant 0 : i32
    %c0_i32_0 = arith.constant 0 : i32
    return %c0_i32, %arg1 : i32, i32
  }
  func.func @transform_3(%arg0: i32, %arg1: i32) -> (i32, i32) {
    %c0_i32 = arith.constant 0 : i32
    %c0_i32_0 = arith.constant 0 : i32
    return %arg0, %c0_i32 : i32, i32
  }
}

</mosaic_0001>

<llo_original>
// kernel: seq_language_model_forward.1
$region0: #{seq_language_model_forward.1}
  #allocation0 [shape = 'u32[]', space=smem, size = 0x4, offset = 0x4, fixed_abs, tag = 'smem constant byte address 0x4 - core index']
  #allocation1 [shape = 'u32[144,128]{1,0:T(1,128)}', space=vmem, size = 0x12000, scoped, tag = 'internal scratch']
  #allocation2 [shape = 'f32[1,16,128]{2,1,0:T(8,128)}', space=vmem, size = 0x2000, scoped, tag = 'scratch operand']
  #allocation3 [shape = 'f32[16,1]{1,0:T(8,128)}', space=vmem, size = 0x2000, scoped, tag = 'scratch operand']
  #allocation4 [shape = 'f32[16,1]{1,0:T(8,128)}', space=vmem, size = 0x2000, scoped, tag = 'scratch operand']
  %s0 = inlined_call_operand.vmem [shape: bf16[16,32], index: 0, kind: input, shape index: {}]
  %s1 = inlined_call_operand.vmem [shape: bf16[128,32], index: 1, kind: input, shape index: {}]
  %s2 = inlined_call_operand.vmem [shape: f32[1,128], index: 2, kind: input, shape index: {}]
  %s3 = inlined_call_operand.hbm [shape: f32[16,128], index: 3, kind: output, shape index: {}]
  %s4 = sld [smem:[#allocation0]]
  $region30: #{seq_language_model_forward.1} parent=0
    _
  %s6 = ssub.s32 1, %s4
  %s7 = scalar_select 0, %s6, %s4
  $region1: #{seq_language_model_forward.1} parent=0
    #allocation5 [shape = 'u8[8192]{0}', space=vmem, size = 0x2000, scoped, tag = 'output window, operand 0, single buffered']
    #allocation6 [shape = 's32[1]{0}', space=sflag, size = 0x4, scoped, tag = 'scoped memory for seq_language_model_forward.1']
    %8 = vsyncpa [#allocation6], 0
    // Predicated region
    $region2: #{seq_language_model_forward.1} parent=1 // pred_check
      _
    $region3: #{seq_language_model_forward.1} parent=1 // pred_check_branch
      %10 = sbr.rel (0) target = $region5
    $region4: #{seq_language_model_forward.1} parent=1 // pred_region
      _
    $region5: #{seq_language_model_forward.1} parent=1 // pred_fallthru
      _
    // Predicated region
    $region6: #{seq_language_model_forward.1} parent=1 // pred_check
      _
    $region7: #{seq_language_model_forward.1} parent=1 // pred_check_branch
      %12 = sbr.rel (0) target = $region9
    $region8: #{seq_language_model_forward.1} parent=1 // pred_region
      _
    $region9: #{seq_language_model_forward.1} parent=1 // pred_fallthru
      _
    // Predicated region
    $region10: #{seq_language_model_forward.1} parent=1 // pred_check
      _
    $region11: #{seq_language_model_forward.1} parent=1 // pred_check_branch
      %14 = sbr.rel (0) target = $region13
    $region12: #{seq_language_model_forward.1} parent=1 // pred_region
      _
    $region13: #{seq_language_model_forward.1} parent=1 // pred_fallthru
      _
    %p16 = scmp.eq.s32.totalorder 0, 0
    // Predicated region
    $region14: #{seq_language_model_forward.1} parent=1 // pred_check
      %p17 = pneg %p16
    $region15: #{seq_language_model_forward.1} parent=1 // pred_check_branch
      %19 = sbr.rel (%p17) target = $region17
    $region16: #{seq_language_model_forward.1} parent=1 // pred_region
      %vm20 = vcmask 7168
      %21 = vst.msk [vmem:[#allocation3] sm:$0xff] %vm20, -inf
      %22 = vst.msk [vmem:[#allocation3 + $0x8] sm:$0xff] %vm20, -inf
      %23 = vst.msk [vmem:[#allocation4] sm:$0xff] %vm20, 0.0
      %24 = vst.msk [vmem:[#allocation4 + $0x8] sm:$0xff] %vm20, 0.0
    $region17: #{seq_language_model_forward.1} parent=1 // pred_fallthru
      _
    %v25 = vld [vmem:[%s0] sm:$0xf]
    %v26 = vld [vmem:[%s0 + $0x4] sm:$0xf]
    %v27 = vld [vmem:[%s1] sm:$0xf]
    %v28 = vld [vmem:[%s1 + $0x4] sm:$0xf]
    %v29 = vld [vmem:[%s1 + $0x8] sm:$0xf]
    %v30 = vld [vmem:[%s1 + $0xc] sm:$0xf]
    %v31 = vld [vmem:[%s1 + $0x10] sm:$0xf]
    %v32 = vld [vmem:[%s1 + $0x14] sm:$0xf]
    %v33 = vld [vmem:[%s1 + $0x18] sm:$0xf]
    %v34 = vld [vmem:[%s1 + $0x1c] sm:$0xf]
    %v35 = vld [vmem:[%s1 + $0x20] sm:$0xf]
    %v36 = vld [vmem:[%s1 + $0x24] sm:$0xf]
    %v37 = vld [vmem:[%s1 + $0x28] sm:$0xf]
    %v38 = vld [vmem:[%s1 + $0x2c] sm:$0xf]
    %v39 = vld [vmem:[%s1 + $0x30] sm:$0xf]
    %v40 = vld [vmem:[%s1 + $0x34] sm:$0xf]
    %v41 = vld [vmem:[%s1 + $0x38] sm:$0xf]
    %v42 = vld [vmem:[%s1 + $0x3c] sm:$0xf]
    %v43 = vld [vmem:[%s2] sm:$0x1]
    %v45 = vlaneseq
    %v46 = vshrl.u32 %v45, 7
    %v47 = vsub.s32 0, %v46
    %v48 = vrot.slane %v43, %v47
    %v52 = vunpack.c.l.b16 %v25
    %v53 = vunpack.c.l.b16 %v26
    %v54 = vpack.c.b16 %v53, %v52
    %v71 = vunpack.c.l.b16 %v27
    %v72 = vunpack.c.l.b16 %v28
    %v73 = vunpack.c.l.b16 %v29
    %v74 = vunpack.c.l.b16 %v30
    %v75 = vunpack.c.l.b16 %v31
    %v76 = vunpack.c.l.b16 %v32
    %v77 = vunpack.c.l.b16 %v33
    %v78 = vunpack.c.l.b16 %v34
    %v79 = vunpack.c.l.b16 %v35
    %v80 = vunpack.c.l.b16 %v36
    %v81 = vunpack.c.l.b16 %v37
    %v82 = vunpack.c.l.b16 %v38
    %v83 = vunpack.c.l.b16 %v39
    %v84 = vunpack.c.l.b16 %v40
    %v85 = vunpack.c.l.b16 %v41
    %v86 = vunpack.c.l.b16 %v42
    %v87 = vpack.c.b16 %v72, %v71
    %v88 = vpack.c.b16 %v74, %v73
    %v89 = vpack.c.b16 %v76, %v75
    %v90 = vpack.c.b16 %v78, %v77
    %v91 = vpack.c.b16 %v80, %v79
    %v92 = vpack.c.b16 %v82, %v81
    %v93 = vpack.c.b16 %v84, %v83
    %v94 = vpack.c.b16 %v86, %v85
    %vm95 = vcmask 261120
    %v97 = vsel %vm95, %v54, 0
    %v100 = vsel %vm95, %v87, 0
    %v103 = vsel %vm95, %v88, 0
    %v106 = vsel %vm95, %v89, 0
    %v109 = vsel %vm95, %v90, 0
    %v112 = vsel %vm95, %v91, 0
    %v115 = vsel %vm95, %v92, 0
    %v118 = vsel %vm95, %v93, 0
    %v121 = vsel %vm95, %v94, 0
    %123 = vmatprep.subr.bf16.mxu0 0
    %124 = vmatpush1.bf16.xpose.msra.mxu0 %v121
    %125 = vmatprep.subr.bf16.mxu0 0
    %126 = vmatpush1.bf16.xpose.msra.mxu0 %v118
    %127 = vmatprep.subr.bf16.mxu0 0
    %128 = vmatpush1.bf16.xpose.msra.mxu0 %v115
    %129 = vmatprep.subr.bf16.mxu0 0
    %130 = vmatpush1.bf16.xpose.msra.mxu0 %v112
    %131 = vmatprep.subr.bf16.mxu0 0
    %132 = vmatpush1.bf16.xpose.msra.mxu0 %v109
    %133 = vmatprep.subr.bf16.mxu0 0
    %134 = vmatpush1.bf16.xpose.msra.mxu0 %v106
    %135 = vmatprep.subr.bf16.mxu0 0
    %136 = vmatpush1.bf16.xpose.msra.mxu0 %v103
    %137 = vmatprep.subr.bf16.mxu0 0
    %138 = vmatpush1.bf16.xpose.msra.mxu0 %v100
    %139 = vmatprep.subr.bf16.mxu0 0
    %140 = vmatpush2.bf16.xpose.msra.mxu0 0
    %141 = vmatprep.subr.bf16.mxu0 0
    %142 = vmatpush2.bf16.xpose.msra.mxu0 0
    %143 = vmatprep.subr.bf16.mxu0 0
    %144 = vmatpush2.bf16.xpose.msra.mxu0 0
    %145 = vmatprep.subr.bf16.mxu0 0
    %146 = vmatpush2.bf16.xpose.msra.mxu0 0
    %147 = vmatprep.subr.bf16.mxu0 0
    %148 = vmatpush2.bf16.xpose.msra.mxu0 0
    %149 = vmatprep.subr.bf16.mxu0 0
    %150 = vmatpush2.bf16.xpose.msra.mxu0 0
    %151 = vmatprep.subr.bf16.mxu0 0
    %152 = vmatpush2.bf16.xpose.msra.mxu0 0
    %153 = vmatprep.subr.bf16.mxu0 0
    %154 = vmatpush2.bf16.xpose.msra.mxu0 0
    %155 = vmatprep.mubr.bf16.mxu0 0
    %156 = vmatmul.mubr.bf16.gmra.mxu0 %v97
    %v157 = vpop.f32.mrf.mxu0
    %v158 = vadd.f32 %v48, %v157
    %v159 = vpop.f32.mrf.mxu0
    %v160 = vpop.f32.mrf.mxu0
    %v161 = vadd.f32 %v48, %v160
    %v162 = vpop.f32.mrf.mxu0
    %163 = vdwg.mxu0
    %v164 = vld [vmem:[#allocation3] sm:$0xff]
    %v165 = vld [vmem:[#allocation3 + $0x8] sm:$0xff]
    %166 = vmax.xlane.f32.xlu0 %v158
    %v167 = vpop.xlane.xlu0 %166
    %168 = vmax.xlane.f32.xlu0 %v161
    %v169 = vpop.xlane.xlu0 %168
    %v170 = vmax.f32 %v164, %v167
    %v171 = vmax.f32 %v165, %v169
    %v172 = vsub.f32 %v164, %v170
    %v173 = vsub.f32 %v165, %v171
    %v174 = vmul.f32 %v172, 1.442695
    %v175 = vpow.pop %v174
    %v176 = vmul.f32 %v173, 1.442695
    %v177 = vpow.pop %v176
    %v178 = vld [vmem:[#allocation4] sm:$0xff]
    %v179 = vld [vmem:[#allocation4 + $0x8] sm:$0xff]
    %v180 = vmul.f32 %v175, %v178
    %v181 = vmul.f32 %v177, %v179
    %183 = vset.pattern.permute.xlu0 0
    %184 = vperm.xlu0 %183, %v170
    %v185 = vpop.permute.xlu0 %184
    %188 = vset.pattern.permute.xlu0 0
    %189 = vperm.xlu0 %188, %v171
    %v190 = vpop.permute.xlu0 %189
    %v192 = vsub.f32 %v158, %v185
    %v193 = vsub.f32 %v161, %v190
    %v194 = vmul.f32 %v192, 1.442695
    %v195 = vpow.pop %v194
    %v196 = vmul.f32 %v193, 1.442695
    %v197 = vpow.pop %v196
    %198 = vadd.xlane.f32.xlu0 %v195
    %v199 = vpop.xlane.xlu0 %198
    %200 = vadd.xlane.f32.xlu0 %v197
    %v201 = vpop.xlane.xlu0 %200
    %v202 = vadd.f32 %v180, %v199
    %v203 = vadd.f32 %v181, %v201
    %vm204 = vcmask 7168
    %205 = vst.msk [vmem:[#allocation3] sm:$0xff] %vm204, %v170
    %206 = vst.msk [vmem:[#allocation3 + $0x8] sm:$0xff] %vm204, %v171
    %207 = vst.msk [vmem:[#allocation4] sm:$0xff] %vm204, %v202
    %208 = vst.msk [vmem:[#allocation4 + $0x8] sm:$0xff] %vm204, %v203
    %s209 = smul.u32 0, 16
    %s210 = scalar_lea.vmem [#allocation2], %s209
    %211 = vst [vmem:[%s210] sm:$0xff] %v158
    %212 = vst [vmem:[%s210 + $0x8] sm:$0xff] %v161
    // Predicated region
    $region18: #{seq_language_model_forward.1} parent=1 // pred_check
      %p213 = pneg %p16
    $region19: #{seq_language_model_forward.1} parent=1 // pred_check_branch
      %215 = sbr.rel (%p213) target = $region21
    $region20: #{seq_language_model_forward.1} parent=1 // pred_region
      %v216 = vlog2.pop %v202
      %v217 = vmul.f32 %v216, 0.6931472
      %v218 = vlog2.pop %v203
      %v219 = vmul.f32 %v218, 0.6931472
      %v220 = vadd.f32 %v170, %v217
      %v221 = vadd.f32 %v171, %v219
      %v222 = vld [vmem:[#allocation2] sm:$0xff]
      %v223 = vld [vmem:[#allocation2 + $0x8] sm:$0xff]
      %225 = vset.pattern.permute.xlu0 0
      %226 = vperm.xlu0 %225, %v220
      %v227 = vpop.permute.xlu0 %226
      %230 = vset.pattern.permute.xlu0 0
      %231 = vperm.xlu0 %230, %v221
      %v232 = vpop.permute.xlu0 %231
      %v234 = vsub.f32 %v222, %v227
      %v235 = vsub.f32 %v223, %v232
      %236 = vst [vmem:[#allocation5] sm:$0xff] %v234
      %237 = vst [vmem:[#allocation5 + $0x8] sm:$0xff] %v235
    $region21: #{seq_language_model_forward.1} parent=1 // pred_fallthru
      _
    // Predicated region
    $region22: #{seq_language_model_forward.1} parent=1 // pred_check
      _
    $region23: #{seq_language_model_forward.1} parent=1 // pred_check_branch
      %239 = sbr.rel (0) target = $region25
    $region24: #{seq_language_model_forward.1} parent=1 // pred_region
      %s241 = ssub.s32 256, 256
      %242 = vsyncadd [#allocation6], %s241
      %s243 = sshll.u32 [#allocation5], 4
      %s244 = int_to_ptr.vmem [resolvable:$true] %s243
      %249 = dma.vmem_to_hbm [thread:$0]  %s244, 256, %s3, [#allocation6], 128, 128, 8
    $region25: #{seq_language_model_forward.1} parent=1 // pred_fallthru
      _
    // Predicated region
    $region26: #{seq_language_model_forward.1} parent=1 // pred_check
      _
    $region27: #{seq_language_model_forward.1} parent=1 // pred_check_branch
      %251 = sbr.rel (0) target = $region29
    $region28: #{seq_language_model_forward.1} parent=1 // pred_region
      %252 = dma.done [#allocation6], 256
    $region29: #{seq_language_model_forward.1} parent=1 // pred_fallthru
      _
    %253 = vsyncpa [#allocation6], 1

</llo_original>
